<compile_context>
chip_gen: v7x
topology: tpu7x:2x2x1
jax: 0.10.0
libtpu: 0.0.40
codegen_flags: <defaults>
</compile_context>

<pallas_src>
import functools

import jax
import jax.numpy as jnp
from jax.experimental import pallas as pl
from jax.experimental.pallas import tpu as pltpu

LANE = 128
ACC_ROWS = 32                    # per-core accumulator block (4 vregs -> ILP)
TARGET_BLOCK_BYTES = 512 * 1024  # per-input block size, dtype-aware row count


def _round_up(x, m):
    return ((x + m - 1) // m) * m


def _bce_blur_kernel(pred_ref, true_ref, out_ref, *, alpha, rows,
                     block_rows, num_blocks, steps_per_core):
    c = pl.program_id(0)
    i = pl.program_id(1)
    block_id = c * steps_per_core + i
    inv_alpha = 1.0 / (alpha + 0.0001)

    # Always init the per-core resident accumulator (even if this core's first
    # step turns out to be an overhang step whose compute is skipped).
    @pl.when(i == 0)
    def _init():
        out_ref[...] = jnp.zeros_like(out_ref)

    def compute(mask_tail):
        x = pred_ref[...].astype(jnp.float32)
        y = true_ref[...].astype(jnp.float32)

        # Numerically-stable BCEWithLogits (reduction='none'):
        #   max(x, 0) - x*y + log1p(exp(-|x|))
        # exp(-|x|) is reused for the stable sigmoid.
        e = jnp.exp(-jnp.abs(x))
        bce = jnp.maximum(x, 0.0) - x * y + jnp.log1p(e)
        r = pl.reciprocal(1.0 + e, approx=True)        # EUP vrcp
        p = jnp.where(x >= 0.0, r, e * r)              # sigmoid(x)
        alpha_factor = 1.0 - jnp.exp((p - y - 1.0) * inv_alpha)
        loss = bce * alpha_factor

        if mask_tail:
            # Row-granular validity (the slab is a 128-aligned prefix, so every
            # lane of an in-range row is real data).  One iota, one select.
            # Garbage rows may produce NaN/Inf in `loss`, but the select never
            # propagates unselected lanes, so the accumulator stays clean.
            row = jax.lax.broadcasted_iota(jnp.int32, (block_rows, LANE), 0)
            valid = (block_id * block_rows + row) < rows
            loss = jnp.where(valid, loss, 0.0)

        # Reduce the block onto 4 independent (8,128) vreg chains and
        # accumulate into the per-core resident (32,128) output block.
        out_ref[...] += loss.reshape(-1, ACC_ROWS, LANE).sum(axis=0)

    in_range = block_id < num_blocks
    needs_tail_mask = (num_blocks * block_rows != rows)

    if needs_tail_mask:
        is_tail = block_id == num_blocks - 1

        @pl.when(jnp.logical_and(in_range, jnp.logical_not(is_tail)))
        def _body():
            compute(False)

        @pl.when(is_tail)
        def _tail():
            compute(True)
    else:
        @pl.when(in_range)
        def _body():
            compute(False)


def _bce_blur_elementwise(x, y, alpha):
    """Plain-jnp per-element loss (used only for the <128-element remainder)."""
    x = x.astype(jnp.float32)
    y = y.astype(jnp.float32)
    e = jnp.exp(-jnp.abs(x))
    bce = jnp.maximum(x, 0.0) - x * y + jnp.log1p(e)
    p = jax.nn.sigmoid(x)
    af = 1.0 - jnp.exp((p - y - 1.0) / (alpha + 0.0001))
    return bce * af


def bce_blur_with_logits_loss(pred, true, alpha=0.05):
    """Pallas equivalent of BCEBlurWithLogitsLoss(alpha).forward(pred, true)."""
    assert pred.shape == true.shape
    n_elem = int(pred.size)
    assert n_elem > 0
    alpha = float(alpha)  # NOTE: alpha is baked at trace time (Python const).

    pred_f = pred.reshape(-1)
    true_f = true.reshape(-1)
    rows = n_elem // LANE
    n_main = rows * LANE
    rem = n_elem - n_main

    total = jnp.float32(0.0)

    if rows > 0:
        # 128-aligned prefix, reshaped into a lane-dense (rows, 128) slab.
        # No padding copy; the prefix slice is only taken when rem > 0.
        if rem:
            pred_main = jax.lax.slice(pred_f, (0,), (n_main,))
            true_main = jax.lax.slice(true_f, (0,), (n_main,))
        else:
            pred_main, true_main = pred_f, true_f
        pred2 = pred_main.reshape(rows, LANE)
        true2 = true_main.reshape(rows, LANE)

        # Dtype-aware block rows: keep bytes-per-block (DMA granularity)
        # constant at ~512 KiB (1024 rows f32, 2048 rows bf16).
        itemsize = jnp.dtype(pred.dtype).itemsize
        max_rows = max(ACC_ROWS,
                       (TARGET_BLOCK_BYTES // (LANE * itemsize))
                       // ACC_ROWS * ACC_ROWS)
        block_rows = min(max_rows, _round_up(rows, ACC_ROWS))
        num_blocks = pl.cdiv(rows, block_rows)
        ncores = min(2, num_blocks)                 # megacore split on v7x
        steps_per_core = pl.cdiv(num_blocks, ncores)

        kernel = functools.partial(
            _bce_blur_kernel,
            alpha=alpha,
            rows=rows,
            block_rows=block_rows,
            num_blocks=num_blocks,
            steps_per_core=steps_per_core,
        )

        # Clamp the block index so idle / overhanging grid steps re-read a
        # valid block; their compute is skipped in-kernel via pl.when.
        def in_map(c, i):
            return (jnp.minimum(c * steps_per_core + i, num_blocks - 1), 0)

        partials = pl.pallas_call(
            kernel,
            out_shape=jax.ShapeDtypeStruct((ncores * ACC_ROWS, LANE),
                                           jnp.float32),
            grid_spec=pltpu.PrefetchScalarGridSpec(
                num_scalar_prefetch=0,
                grid=(ncores, steps_per_core),
                in_specs=[
                    pl.BlockSpec((block_rows, LANE), in_map),
                    pl.BlockSpec((block_rows, LANE), in_map),
                ],
                out_specs=pl.BlockSpec((ACC_ROWS, LANE), lambda c, i: (c, 0)),
            ),
            compiler_params=pltpu.CompilerParams(
                dimension_semantics=("parallel", "arbitrary"),
            ),
        )(pred2, true2)

        total = total + jnp.sum(partials)

    if rem:
        # <=127 leftover elements: fold in with plain jnp (negligible work,
        # avoids any padding copy of the big tensors).
        xr = pred_f[n_main:]
        yr = true_f[n_main:]
        total = total + jnp.sum(_bce_blur_elementwise(xr, yr, alpha))

    return total / n_elem


def _reference(pred, true, alpha=0.05):
    x = pred.astype(jnp.float32)
    y = true.astype(jnp.float32)
    bce = jnp.maximum(x, 0.0) - x * y + jnp.log1p(jnp.exp(-jnp.abs(x)))
    p = jax.nn.sigmoid(x)
    dx = p - y
    af = 1.0 - jnp.exp((dx - 1.0) / (alpha + 0.0001))
    return jnp.mean(bce * af)


if __name__ == "__main__":
    key = jax.random.PRNGKey(0)
    k1, k2, k3, k4 = jax.random.split(key, 4)

    # NCHW-shaped logits/targets, as the YOLO loss would receive them
    # (2*4*16*16 = 2048 elements -> exactly lane-aligned, no remainder path).
    pred = jax.random.normal(k1, (2, 4, 16, 16), dtype=jnp.float32)
    true = (jax.random.uniform(k2, (2, 4, 16, 16)) > 0.5).astype(jnp.float32)

    loss = bce_blur_with_logits_loss(pred, true, alpha=0.05)
    jax.block_until_ready(loss)
    ref = _reference(pred, true, alpha=0.05)
    # Tolerance loosened vs f32-exact because of approx=True reciprocal.
    assert jnp.allclose(loss, ref, rtol=1e-3, atol=1e-3), (loss, ref)

    # Non-lane-aligned shape: exercises the aligned-prefix + remainder path
    # and the in-kernel tail-row masking (945 elems -> 7 rows + 49 leftover).
    pred_b = jax.random.normal(k3, (3, 5, 7, 9), dtype=jnp.float32)
    true_b = (jax.random.uniform(k4, (3, 5, 7, 9)) > 0.5).astype(jnp.float32)
    loss_b = bce_blur_with_logits_loss(pred_b, true_b, alpha=0.05)
    jax.block_until_ready(loss_b)
    ref_b = _reference(pred_b, true_b, alpha=0.05)
    assert jnp.allclose(loss_b, ref_b, rtol=1e-3, atol=1e-3), (loss_b, ref_b)

    print("KERNEL_OK")
</pallas_src>

<mosaic_0001>
module attributes {stable_mosaic.version = 11 : i64} {
  func.func @_bce_blur_kernel(%arg0: i32, %arg1: i32, %arg2: memref<32x128xf32, #tpu.memory_space<vmem>>, %arg3: memref<32x128xf32, #tpu.memory_space<vmem>>, %arg4: memref<32x128xf32, #tpu.memory_space<vmem>>) attributes {dimension_semantics = [#tpu.dimension_semantics<parallel>, #tpu.dimension_semantics<arbitrary>], iteration_bounds = array<i64: 1, 1>, scalar_prefetch = 0 : i64, scratch_operands = 0 : i64, tpu.core_type = #tpu.core_type<tc>, window_params = [{transform_indices = @transform_0, window_bounds = array<i64: 32, 128>}, {transform_indices = @transform_1, window_bounds = array<i64: 32, 128>}, {transform_indices = @transform_2, window_bounds = array<i64: 32, 128>}]} {
    %c1_i32 = arith.constant 1 : i32
    %0 = arith.muli %arg0, %c1_i32 : i32
    %1 = arith.addi %0, %arg1 : i32
    %c0_i32 = arith.constant 0 : i32
    %2 = arith.cmpi eq, %arg1, %c0_i32 : i32
    %3 = arith.extui %2 : i1 to i32
    %c0_i32_0 = arith.constant 0 : i32
    %4 = arith.cmpi ne, %3, %c0_i32_0 : i32
    scf.if %4 {
      %cst = arith.constant 0.000000e+00 : f32
      %13 = vector.broadcast %cst : f32 to vector<32x128xf32>
      %c0 = arith.constant 0 : index
      %c0_5 = arith.constant 0 : index
      %14 = vector.load %arg4[%c0, %c0_5] : memref<32x128xf32, #tpu.memory_space<vmem>>, vector<32x128xf32>
      tpu.vector_store %arg4[%c0, %c0_5], %13 {strides = array<i32>} : memref<32x128xf32, #tpu.memory_space<vmem>>, vector<32x128xf32>,
    } else {
    }
    %c1_i32_1 = arith.constant 1 : i32
    %5 = arith.cmpi slt, %1, %c1_i32_1 : i32
    %c0_i32_2 = arith.constant 0 : i32
    %6 = arith.cmpi eq, %1, %c0_i32_2 : i32
    %true = arith.constant true
    %7 = arith.xori %6, %true : i1
    %8 = arith.andi %5, %7 : i1
    %9 = arith.extui %8 : i1 to i32
    %c0_i32_3 = arith.constant 0 : i32
    %10 = arith.cmpi ne, %9, %c0_i32_3 : i32
    scf.if %10 {
      %c0 = arith.constant 0 : index
      %c0_5 = arith.constant 0 : index
      %13 = vector.load %arg2[%c0, %c0_5] : memref<32x128xf32, #tpu.memory_space<vmem>>, vector<32x128xf32>
      %c0_6 = arith.constant 0 : index
      %c0_7 = arith.constant 0 : index
      %14 = vector.load %arg3[%c0_6, %c0_7] : memref<32x128xf32, #tpu.memory_space<vmem>>, vector<32x128xf32>
      %15 = math.absf %13 : vector<32x128xf32>
      %cst = arith.constant 0.000000e+00 : f32
      %16 = vector.broadcast %cst : f32 to vector<32x128xf32>
      %17 = arith.subf %16, %15 : vector<32x128xf32>
      %18 = math.exp %17 : vector<32x128xf32>
      %cst_8 = arith.constant 0.000000e+00 : f32
      %19 = vector.broadcast %cst_8 : f32 to vector<32x128xf32>
      %20 = arith.maximumf %13, %19 : vector<32x128xf32>
      %21 = arith.mulf %13, %14 : vector<32x128xf32>
      %22 = arith.subf %20, %21 : vector<32x128xf32>
      %23 = math.log1p %18 : vector<32x128xf32>
      %24 = arith.addf %22, %23 : vector<32x128xf32>
      %cst_9 = arith.constant 1.000000e+00 : f32
      %25 = vector.broadcast %cst_9 : f32 to vector<32x128xf32>
      %26 = arith.addf %25, %18 : vector<32x128xf32>
      %27 = tpu.reciprocal %26 {approx = true} : vector<32x128xf32> -> vector<32x128xf32>
      %cst_10 = arith.constant 0.000000e+00 : f32
      %28 = vector.broadcast %cst_10 : f32 to vector<32x128xf32>
      %29 = arith.cmpf oge, %13, %28 : vector<32x128xf32>
      %30 = arith.mulf %18, %27 : vector<32x128xf32>
      %31 = arith.select %29, %27, %30 : vector<32x128xi1>, vector<32x128xf32>
      %32 = arith.subf %31, %14 : vector<32x128xf32>
      %cst_11 = arith.constant 1.000000e+00 : f32
      %33 = vector.broadcast %cst_11 : f32 to vector<32x128xf32>
      %34 = arith.subf %32, %33 : vector<32x128xf32>
      %cst_12 = arith.constant 19.9600792 : f32
      %35 = vector.broadcast %cst_12 : f32 to vector<32x128xf32>
      %36 = arith.mulf %34, %35 : vector<32x128xf32>
      %37 = math.exp %36 : vector<32x128xf32>
      %cst_13 = arith.constant 1.000000e+00 : f32
      %38 = vector.broadcast %cst_13 : f32 to vector<32x128xf32>
      %39 = arith.subf %38, %37 : vector<32x128xf32>
      %40 = arith.mulf %24, %39 : vector<32x128xf32>
      %c0_14 = arith.constant 0 : index
      %c0_15 = arith.constant 0 : index
      %41 = vector.load %arg4[%c0_14, %c0_15] : memref<32x128xf32, #tpu.memory_space<vmem>>, vector<32x128xf32>
      %42 = vector.shape_cast %40 : vector<32x128xf32> to vector<1x32x128xf32>
      %cst_16 = arith.constant dense<0.000000e+00> : vector<32x128xf32>
      %43 = vector.multi_reduction <add>, %42, %cst_16 [0] : vector<1x32x128xf32> to vector<32x128xf32>
      %44 = arith.addf %41, %43 : vector<32x128xf32>
      %c0_17 = arith.constant 0 : index
      %c0_18 = arith.constant 0 : index
      %45 = vector.load %arg4[%c0_17, %c0_18] : memref<32x128xf32, #tpu.memory_space<vmem>>, vector<32x128xf32>
      tpu.vector_store %arg4[%c0_17, %c0_18], %44 {strides = array<i32>} : memref<32x128xf32, #tpu.memory_space<vmem>>, vector<32x128xf32>,
    } else {
    }
    %11 = arith.extui %6 : i1 to i32
    %c0_i32_4 = arith.constant 0 : i32
    %12 = arith.cmpi ne, %11, %c0_i32_4 : i32
    scf.if %12 {
      %c0 = arith.constant 0 : index
      %c0_5 = arith.constant 0 : index
      %13 = vector.load %arg2[%c0, %c0_5] : memref<32x128xf32, #tpu.memory_space<vmem>>, vector<32x128xf32>
      %c0_6 = arith.constant 0 : index
      %c0_7 = arith.constant 0 : index
      %14 = vector.load %arg3[%c0_6, %c0_7] : memref<32x128xf32, #tpu.memory_space<vmem>>, vector<32x128xf32>
      %15 = math.absf %13 : vector<32x128xf32>
      %cst = arith.constant 0.000000e+00 : f32
      %16 = vector.broadcast %cst : f32 to vector<32x128xf32>
      %17 = arith.subf %16, %15 : vector<32x128xf32>
      %18 = math.exp %17 : vector<32x128xf32>
      %cst_8 = arith.constant 0.000000e+00 : f32
      %19 = vector.broadcast %cst_8 : f32 to vector<32x128xf32>
      %20 = arith.maximumf %13, %19 : vector<32x128xf32>
      %21 = arith.mulf %13, %14 : vector<32x128xf32>
      %22 = arith.subf %20, %21 : vector<32x128xf32>
      %23 = math.log1p %18 : vector<32x128xf32>
      %24 = arith.addf %22, %23 : vector<32x128xf32>
      %cst_9 = arith.constant 1.000000e+00 : f32
      %25 = vector.broadcast %cst_9 : f32 to vector<32x128xf32>
      %26 = arith.addf %25, %18 : vector<32x128xf32>
      %27 = tpu.reciprocal %26 {approx = true} : vector<32x128xf32> -> vector<32x128xf32>
      %cst_10 = arith.constant 0.000000e+00 : f32
      %28 = vector.broadcast %cst_10 : f32 to vector<32x128xf32>
      %29 = arith.cmpf oge, %13, %28 : vector<32x128xf32>
      %30 = arith.mulf %18, %27 : vector<32x128xf32>
      %31 = arith.select %29, %27, %30 : vector<32x128xi1>, vector<32x128xf32>
      %32 = arith.subf %31, %14 : vector<32x128xf32>
      %cst_11 = arith.constant 1.000000e+00 : f32
      %33 = vector.broadcast %cst_11 : f32 to vector<32x128xf32>
      %34 = arith.subf %32, %33 : vector<32x128xf32>
      %cst_12 = arith.constant 19.9600792 : f32
      %35 = vector.broadcast %cst_12 : f32 to vector<32x128xf32>
      %36 = arith.mulf %34, %35 : vector<32x128xf32>
      %37 = math.exp %36 : vector<32x128xf32>
      %cst_13 = arith.constant 1.000000e+00 : f32
      %38 = vector.broadcast %cst_13 : f32 to vector<32x128xf32>
      %39 = arith.subf %38, %37 : vector<32x128xf32>
      %40 = arith.mulf %24, %39 : vector<32x128xf32>
      %41 = tpu.iota {dimensions = array<i32: 0>} : vector<32x128xi32>
      %c32_i32 = arith.constant 32 : i32
      %42 = arith.muli %1, %c32_i32 : i32
      %43 = vector.broadcast %42 : i32 to vector<32x128xi32>
      %44 = arith.addi %43, %41 : vector<32x128xi32>
      %c16_i32 = arith.constant 16 : i32
      %45 = vector.broadcast %c16_i32 : i32 to vector<32x128xi32>
      %46 = arith.cmpi slt, %44, %45 : vector<32x128xi32>
      %cst_14 = arith.constant 0.000000e+00 : f32
      %47 = vector.broadcast %cst_14 : f32 to vector<32x128xf32>
      %48 = arith.select %46, %40, %47 : vector<32x128xi1>, vector<32x128xf32>
      %c0_15 = arith.constant 0 : index
      %c0_16 = arith.constant 0 : index
      %49 = vector.load %arg4[%c0_15, %c0_16] : memref<32x128xf32, #tpu.memory_space<vmem>>, vector<32x128xf32>
      %50 = vector.shape_cast %48 : vector<32x128xf32> to vector<1x32x128xf32>
      %cst_17 = arith.constant dense<0.000000e+00> : vector<32x128xf32>
      %51 = vector.multi_reduction <add>, %50, %cst_17 [0] : vector<1x32x128xf32> to vector<32x128xf32>
      %52 = arith.addf %49, %51 : vector<32x128xf32>
      %c0_18 = arith.constant 0 : index
      %c0_19 = arith.constant 0 : index
      %53 = vector.load %arg4[%c0_18, %c0_19] : memref<32x128xf32, #tpu.memory_space<vmem>>, vector<32x128xf32>
      tpu.vector_store %arg4[%c0_18, %c0_19], %52 {strides = array<i32>} : memref<32x128xf32, #tpu.memory_space<vmem>>, vector<32x128xf32>,
    } else {
    }
    return
  }
  func.func @transform_0(%arg0: i32, %arg1: i32) -> (i32, i32) {
    %c1_i32 = arith.constant 1 : i32
    %0 = arith.muli %arg0, %c1_i32 : i32
    %1 = arith.addi %0, %arg1 : i32
    %c0_i32 = arith.constant 0 : i32
    %2 = arith.minsi %1, %c0_i32 : i32
    %c0_i32_0 = arith.constant 0 : i32
    %c0_i32_1 = arith.constant 0 : i32
    return %2, %c0_i32_0 : i32, i32
  }
  func.func @transform_1(%arg0: i32, %arg1: i32) -> (i32, i32) {
    %c1_i32 = arith.constant 1 : i32
    %0 = arith.muli %arg0, %c1_i32 : i32
    %1 = arith.addi %0, %arg1 : i32
    %c0_i32 = arith.constant 0 : i32
    %2 = arith.minsi %1, %c0_i32 : i32
    %c0_i32_0 = arith.constant 0 : i32
    %c0_i32_1 = arith.constant 0 : i32
    return %2, %c0_i32_0 : i32, i32
  }
  func.func @transform_2(%arg0: i32, %arg1: i32) -> (i32, i32) {
    %c0_i32 = arith.constant 0 : i32
    %c0_i32_0 = arith.constant 0 : i32
    return %arg0, %c0_i32 : i32, i32
  }
}

</mosaic_0001>

<llo_original>
// kernel: tpu_custom_call.1
$region0: #{tpu_custom_call.1}
  #allocation0 [shape = 'u32[]', space=smem, size = 0x4, offset = 0x4, fixed_abs, tag = 'smem constant byte address 0x4 - core index']
  #allocation1 [shape = 'u32[144,128]{1,0:T(1,128)}', space=vmem, size = 0x12000, scoped, tag = 'internal scratch']
  %s0 = inlined_call_operand.hbm [shape: f32[16,128], index: 0, kind: input, shape index: {}]
  %s1 = inlined_call_operand.hbm [shape: f32[16,128], index: 1, kind: input, shape index: {}]
  %s2 = inlined_call_operand.hbm [shape: f32[32,128], index: 2, kind: output, shape index: {}]
  %s3 = sld [smem:[#allocation0]]
  $region38: #{tpu_custom_call.1} parent=0
    _
  %s5 = ssub.s32 1, %s3
  %s6 = scalar_select 0, %s5, %s3
  $region1: #{tpu_custom_call.1} parent=0
    #allocation2 [shape = 'u8[16384]{0}', space=vmem, size = 0x4000, scoped, tag = 'input window, operand 0, single buffered']
    #allocation3 [shape = 's32[1]{0}', space=sflag, size = 0x4, scoped, tag = 'scoped memory for tpu_custom_call.1']
    #allocation4 [shape = 's32[1]{0}', space=sflag, size = 0x4, scoped, tag = 'scoped memory for tpu_custom_call.1']
    #allocation5 [shape = 'u8[16384]{0}', space=vmem, size = 0x4000, scoped, tag = 'input window, operand 1, single buffered']
    #allocation6 [shape = 's32[1]{0}', space=sflag, size = 0x4, scoped, tag = 'scoped memory for tpu_custom_call.1']
    #allocation7 [shape = 'u8[16384]{0}', space=vmem, size = 0x4000, scoped, tag = 'output window, operand 0, single buffered']
    %7 = vsyncpa [#allocation3], 0
    %8 = vsyncpa [#allocation6], 0
    %9 = vsyncpa [#allocation4], 0
    // Predicated region
    $region2: #{tpu_custom_call.1} parent=1 // pred_check
      _
    $region3: #{tpu_custom_call.1} parent=1 // pred_check_branch
      %11 = sbr.rel (0) target = $region5
    $region4: #{tpu_custom_call.1} parent=1 // pred_region
      %s12 = sadd.s32 0, 0
      %p13 = scmp.lt.s32.totalorder %s12, 0
      %s14 = scalar_select %p13, %s12, 0
      %s15 = smul.u32 4, %s14
      %s16 = ssub.s32 2, %s15
      %s17 = smul.u32 128, %s16
      %s19 = ssub.s32 512, %s17
      %20 = vsyncadd [#allocation3], %s19
      %p21 = scmp.ne.s32.totalorder 0, %s17
      %s22 = smul.addr %s15, 128
      %s23 = scalar_lea.hbm %s0, %s22
      %s24 = smul.u32 8, %s16
      %s25 = sshll.u32 [#allocation2], 4
      %s26 = int_to_ptr.vmem [resolvable:$true] %s25
      %s27 = sshll.u32 %s24, 4
      %31 = dma.hbm_to_vmem [thread:$0]  (%p21), %s23, %s27, %s26, [#allocation3], 128, 128, 8
    $region5: #{tpu_custom_call.1} parent=1 // pred_fallthru
      _
    // Predicated region
    $region6: #{tpu_custom_call.1} parent=1 // pred_check
      _
    $region7: #{tpu_custom_call.1} parent=1 // pred_check_branch
      %33 = sbr.rel (0) target = $region9
    $region8: #{tpu_custom_call.1} parent=1 // pred_region
      %s34 = sadd.s32 0, 0
      %p35 = scmp.lt.s32.totalorder %s34, 0
      %s36 = scalar_select %p35, %s34, 0
      %s37 = smul.u32 4, %s36
      %s38 = ssub.s32 2, %s37
      %s39 = smul.u32 128, %s38
      %s41 = ssub.s32 512, %s39
      %42 = vsyncadd [#allocation6], %s41
      %p43 = scmp.ne.s32.totalorder 0, %s39
      %s44 = smul.addr %s37, 128
      %s45 = scalar_lea.hbm %s1, %s44
      %s46 = smul.u32 8, %s38
      %s47 = sshll.u32 [#allocation5], 4
      %s48 = int_to_ptr.vmem [resolvable:$true] %s47
      %s49 = sshll.u32 %s46, 4
      %53 = dma.hbm_to_vmem [thread:$0]  (%p43), %s45, %s49, %s48, [#allocation6], 128, 128, 8
    $region9: #{tpu_custom_call.1} parent=1 // pred_fallthru
      _
    // Predicated region
    $region10: #{tpu_custom_call.1} parent=1 // pred_check
      _
    $region11: #{tpu_custom_call.1} parent=1 // pred_check_branch
      %55 = sbr.rel (0) target = $region13
    $region12: #{tpu_custom_call.1} parent=1 // pred_region
      %56 = dma.done [#allocation3], 512
    $region13: #{tpu_custom_call.1} parent=1 // pred_fallthru
      _
    // Predicated region
    $region14: #{tpu_custom_call.1} parent=1 // pred_check
      _
    $region15: #{tpu_custom_call.1} parent=1 // pred_check_branch
      %58 = sbr.rel (0) target = $region17
    $region16: #{tpu_custom_call.1} parent=1 // pred_region
      %59 = dma.done [#allocation6], 512
    $region17: #{tpu_custom_call.1} parent=1 // pred_fallthru
      _
    %s60 = sadd.s32 0, 0
    %p61 = scmp.lt.s32.totalorder %s60, 0
    %s62 = scalar_select %p61, %s60, 0
    %s63 = smul.u32 4, %s62
    %s64 = ssub.s32 2, %s63
    %s65 = smul.u32 128, %s64
    %s66 = sadd.s32 0, 0
    %p67 = scmp.lt.s32.totalorder %s66, 0
    %s68 = scalar_select %p67, %s66, 0
    %s69 = smul.u32 4, %s68
    %s70 = ssub.s32 2, %s69
    %s71 = smul.u32 128, %s70
    %s72 = sadd.s32 0, 0
    %p73 = scmp.eq.s32.totalorder 0, 0
    // Predicated region
    $region18: #{tpu_custom_call.1} parent=1 // pred_check
      %p74 = pneg %p73
    $region19: #{tpu_custom_call.1} parent=1 // pred_check_branch
      %76 = sbr.rel (%p74) target = $region21
    $region20: #{tpu_custom_call.1} parent=1 // pred_region
      %77 = vst [vmem:[#allocation7] sm:$0xff] 0.0
      %78 = vst [vmem:[#allocation7 + $0x8] sm:$0xff] 0.0
      %79 = vst [vmem:[#allocation7 + $0x10] sm:$0xff] 0.0
      %80 = vst [vmem:[#allocation7 + $0x18] sm:$0xff] 0.0
    $region21: #{tpu_custom_call.1} parent=1 // pred_fallthru
      _
    %p81 = scmp.lt.s32.totalorder %s72, 1
    %p82 = scmp.eq.s32.totalorder %s72, 0
    %p83 = scmp.ne.s32.totalorder %s72, 0
    %p84 = pnand %p81, %p83
    %p85 = pneg %p84
    // Predicated region
    $region22: #{tpu_custom_call.1} parent=1 // pred_check
      _
    $region23: #{tpu_custom_call.1} parent=1 // pred_check_branch
      %87 = sbr.rel (%p84) target = $region25
    $region24: #{tpu_custom_call.1} parent=1 // pred_region
      %v88 = vld [vmem:[#allocation2] sm:$0xff]
      %v89 = vld [vmem:[#allocation2 + $0x8] sm:$0xff]
      %v90 = vld [vmem:[#allocation2 + $0x10] sm:$0xff]
      %v91 = vld [vmem:[#allocation2 + $0x18] sm:$0xff]
      %v92 = vld [vmem:[#allocation5] sm:$0xff]
      %v93 = vld [vmem:[#allocation5 + $0x8] sm:$0xff]
      %v94 = vld [vmem:[#allocation5 + $0x10] sm:$0xff]
      %v95 = vld [vmem:[#allocation5 + $0x18] sm:$0xff]
      %v96 = vand.u32 2147483647, %v88
      %v97 = vand.u32 2147483647, %v89
      %v98 = vand.u32 2147483647, %v90
      %v99 = vand.u32 2147483647, %v91
      %v100 = vsub.f32 0.0, %v96
      %v101 = vsub.f32 0.0, %v97
      %v102 = vsub.f32 0.0, %v98
      %v103 = vsub.f32 0.0, %v99
      %v104 = vmul.f32 %v100, 1.442695
      %v105 = vpow.pop %v104
      %v106 = vmul.f32 %v101, 1.442695
      %v107 = vpow.pop %v106
      %v108 = vmul.f32 %v102, 1.442695
      %v109 = vpow.pop %v108
      %v110 = vmul.f32 %v103, 1.442695
      %v111 = vpow.pop %v110
      %v112 = vmax.f32 %v88, 0.0
      %v113 = vmax.f32 %v89, 0.0
      %v114 = vmax.f32 %v90, 0.0
      %v115 = vmax.f32 %v91, 0.0
      %v116 = vmul.f32 %v88, %v92
      %v117 = vmul.f32 %v89, %v93
      %v118 = vmul.f32 %v90, %v94
      %v119 = vmul.f32 %v91, %v95
      %v120 = vsub.f32 %v112, %v116
      %v121 = vsub.f32 %v113, %v117
      %v122 = vsub.f32 %v114, %v118
      %v123 = vsub.f32 %v115, %v119
      %v124 = vadd.f32 %v105, 1.0
      %v125 = vlog2.pop %v124
      %v126 = vmul.f32 %v125, 0.6931472
      %v127 = vmul.f32 -0.5, %v105
      %v128 = vadd.f32 %v127, 1.0
      %v129 = vmul.f32 %v128, %v105
      %v130 = vand.u32 2147483647, %v105
      %vm131 = vcmp.lt.f32.partialorder %v130, 0.0004427343
      %v132 = vsel %vm131, %v129, %v126
      %v133 = vadd.f32 %v107, 1.0
      %v134 = vlog2.pop %v133
      %v135 = vmul.f32 %v134, 0.6931472
      %v136 = vmul.f32 -0.5, %v107
      %v137 = vadd.f32 %v136, 1.0
      %v138 = vmul.f32 %v137, %v107
      %v139 = vand.u32 2147483647, %v107
      %vm140 = vcmp.lt.f32.partialorder %v139, 0.0004427343
      %v141 = vsel %vm140, %v138, %v135
      %v142 = vadd.f32 %v109, 1.0
      %v143 = vlog2.pop %v142
      %v144 = vmul.f32 %v143, 0.6931472
      %v145 = vmul.f32 -0.5, %v109
      %v146 = vadd.f32 %v145, 1.0
      %v147 = vmul.f32 %v146, %v109
      %v148 = vand.u32 2147483647, %v109
      %vm149 = vcmp.lt.f32.partialorder %v148, 0.0004427343
      %v150 = vsel %vm149, %v147, %v144
      %v151 = vadd.f32 %v111, 1.0
      %v152 = vlog2.pop %v151
      %v153 = vmul.f32 %v152, 0.6931472
      %v154 = vmul.f32 -0.5, %v111
      %v155 = vadd.f32 %v154, 1.0
      %v156 = vmul.f32 %v155, %v111
      %v157 = vand.u32 2147483647, %v111
      %vm158 = vcmp.lt.f32.partialorder %v157, 0.0004427343
      %v159 = vsel %vm158, %v156, %v153
      %v160 = vadd.f32 %v120, %v132
      %v161 = vadd.f32 %v121, %v141
      %v162 = vadd.f32 %v122, %v150
      %v163 = vadd.f32 %v123, %v159
      %v164 = vadd.f32 %v105, 1.0
      %v165 = vadd.f32 %v107, 1.0
      %v166 = vadd.f32 %v109, 1.0
      %v167 = vadd.f32 %v111, 1.0
      %v168 = vrcp.pop %v164
      %v169 = vrcp.pop %v165
      %v170 = vrcp.pop %v166
      %v171 = vrcp.pop %v167
      %vm172 = vcmp.ge.f32.partialorder %v88, 0.0
      %vm173 = vcmp.ge.f32.partialorder %v89, 0.0
      %vm174 = vcmp.ge.f32.partialorder %v90, 0.0
      %vm175 = vcmp.ge.f32.partialorder %v91, 0.0
      %v176 = vmul.f32 %v105, %v168
      %v177 = vmul.f32 %v107, %v169
      %v178 = vmul.f32 %v109, %v170
      %v179 = vmul.f32 %v111, %v171
      %v180 = vsel %vm172, %v168, %v176
      %v181 = vsel %vm173, %v169, %v177
      %v182 = vsel %vm174, %v170, %v178
      %v183 = vsel %vm175, %v171, %v179
      %v184 = vsub.f32 %v180, %v92
      %v185 = vsub.f32 %v181, %v93
      %v186 = vsub.f32 %v182, %v94
      %v187 = vsub.f32 %v183, %v95
      %v188 = vsub.f32 %v184, 1.0
      %v189 = vsub.f32 %v185, 1.0
      %v190 = vsub.f32 %v186, 1.0
      %v191 = vsub.f32 %v187, 1.0
      %v192 = vmul.f32 %v188, 19.96008
      %v193 = vmul.f32 %v189, 19.96008
      %v194 = vmul.f32 %v190, 19.96008
      %v195 = vmul.f32 %v191, 19.96008
      %v196 = vmul.f32 %v192, 1.442695
      %v197 = vpow.pop %v196
      %v198 = vmul.f32 %v193, 1.442695
      %v199 = vpow.pop %v198
      %v200 = vmul.f32 %v194, 1.442695
      %v201 = vpow.pop %v200
      %v202 = vmul.f32 %v195, 1.442695
      %v203 = vpow.pop %v202
      %v204 = vsub.f32 1.0, %v197
      %v205 = vsub.f32 1.0, %v199
      %v206 = vsub.f32 1.0, %v201
      %v207 = vsub.f32 1.0, %v203
      %v208 = vmul.f32 %v160, %v204
      %v209 = vmul.f32 %v161, %v205
      %v210 = vmul.f32 %v162, %v206
      %v211 = vmul.f32 %v163, %v207
      %v212 = vld [vmem:[#allocation7] sm:$0xff]
      %v213 = vld [vmem:[#allocation7 + $0x8] sm:$0xff]
      %v214 = vld [vmem:[#allocation7 + $0x10] sm:$0xff]
      %v215 = vld [vmem:[#allocation7 + $0x18] sm:$0xff]
      %v216 = vadd.f32 %v208, 0.0
      %v217 = vadd.f32 %v209, 0.0
      %v218 = vadd.f32 %v210, 0.0
      %v219 = vadd.f32 %v211, 0.0
      %v220 = vadd.f32 %v212, %v216
      %v221 = vadd.f32 %v213, %v217
      %v222 = vadd.f32 %v214, %v218
      %v223 = vadd.f32 %v215, %v219
      %224 = vst [vmem:[#allocation7] sm:$0xff] %v220
      %225 = vst [vmem:[#allocation7 + $0x8] sm:$0xff] %v221
      %226 = vst [vmem:[#allocation7 + $0x10] sm:$0xff] %v222
      %227 = vst [vmem:[#allocation7 + $0x18] sm:$0xff] %v223
    $region25: #{tpu_custom_call.1} parent=1 // pred_fallthru
      _
    // Predicated region
    $region26: #{tpu_custom_call.1} parent=1 // pred_check
      %p228 = pneg %p82
    $region27: #{tpu_custom_call.1} parent=1 // pred_check_branch
      %230 = sbr.rel (%p228) target = $region29
    $region28: #{tpu_custom_call.1} parent=1 // pred_region
      %v231 = vld [vmem:[#allocation2] sm:$0xff]
      %v232 = vld [vmem:[#allocation2 + $0x8] sm:$0xff]
      %v233 = vld [vmem:[#allocation2 + $0x10] sm:$0xff]
      %v234 = vld [vmem:[#allocation2 + $0x18] sm:$0xff]
      %v235 = vld [vmem:[#allocation5] sm:$0xff]
      %v236 = vld [vmem:[#allocation5 + $0x8] sm:$0xff]
      %v237 = vld [vmem:[#allocation5 + $0x10] sm:$0xff]
      %v238 = vld [vmem:[#allocation5 + $0x18] sm:$0xff]
      %v239 = vand.u32 2147483647, %v231
      %v240 = vand.u32 2147483647, %v232
      %v241 = vand.u32 2147483647, %v233
      %v242 = vand.u32 2147483647, %v234
      %v243 = vsub.f32 0.0, %v239
      %v244 = vsub.f32 0.0, %v240
      %v245 = vsub.f32 0.0, %v241
      %v246 = vsub.f32 0.0, %v242
      %v247 = vmul.f32 %v243, 1.442695
      %v248 = vpow.pop %v247
      %v249 = vmul.f32 %v244, 1.442695
      %v250 = vpow.pop %v249
      %v251 = vmul.f32 %v245, 1.442695
      %v252 = vpow.pop %v251
      %v253 = vmul.f32 %v246, 1.442695
      %v254 = vpow.pop %v253
      %v255 = vmax.f32 %v231, 0.0
      %v256 = vmax.f32 %v232, 0.0
      %v257 = vmax.f32 %v233, 0.0
      %v258 = vmax.f32 %v234, 0.0
      %v259 = vmul.f32 %v231, %v235
      %v260 = vmul.f32 %v232, %v236
      %v261 = vmul.f32 %v233, %v237
      %v262 = vmul.f32 %v234, %v238
      %v263 = vsub.f32 %v255, %v259
      %v264 = vsub.f32 %v256, %v260
      %v265 = vsub.f32 %v257, %v261
      %v266 = vsub.f32 %v258, %v262
      %v267 = vadd.f32 %v248, 1.0
      %v268 = vlog2.pop %v267
      %v269 = vmul.f32 %v268, 0.6931472
      %v270 = vmul.f32 -0.5, %v248
      %v271 = vadd.f32 %v270, 1.0
      %v272 = vmul.f32 %v271, %v248
      %v273 = vand.u32 2147483647, %v248
      %vm274 = vcmp.lt.f32.partialorder %v273, 0.0004427343
      %v275 = vsel %vm274, %v272, %v269
      %v276 = vadd.f32 %v250, 1.0
      %v277 = vlog2.pop %v276
      %v278 = vmul.f32 %v277, 0.6931472
      %v279 = vmul.f32 -0.5, %v250
      %v280 = vadd.f32 %v279, 1.0
      %v281 = vmul.f32 %v280, %v250
      %v282 = vand.u32 2147483647, %v250
      %vm283 = vcmp.lt.f32.partialorder %v282, 0.0004427343
      %v284 = vsel %vm283, %v281, %v278
      %v285 = vadd.f32 %v252, 1.0
      %v286 = vlog2.pop %v285
      %v287 = vmul.f32 %v286, 0.6931472
      %v288 = vmul.f32 -0.5, %v252
      %v289 = vadd.f32 %v288, 1.0
      %v290 = vmul.f32 %v289, %v252
      %v291 = vand.u32 2147483647, %v252
      %vm292 = vcmp.lt.f32.partialorder %v291, 0.0004427343
      %v293 = vsel %vm292, %v290, %v287
      %v294 = vadd.f32 %v254, 1.0
      %v295 = vlog2.pop %v294
      %v296 = vmul.f32 %v295, 0.6931472
      %v297 = vmul.f32 -0.5, %v254
      %v298 = vadd.f32 %v297, 1.0
      %v299 = vmul.f32 %v298, %v254
      %v300 = vand.u32 2147483647, %v254
      %vm301 = vcmp.lt.f32.partialorder %v300, 0.0004427343
      %v302 = vsel %vm301, %v299, %v296
      %v303 = vadd.f32 %v263, %v275
      %v304 = vadd.f32 %v264, %v284
      %v305 = vadd.f32 %v265, %v293
      %v306 = vadd.f32 %v266, %v302
      %v307 = vadd.f32 %v248, 1.0
      %v308 = vadd.f32 %v250, 1.0
      %v309 = vadd.f32 %v252, 1.0
      %v310 = vadd.f32 %v254, 1.0
      %v311 = vrcp.pop %v307
      %v312 = vrcp.pop %v308
      %v313 = vrcp.pop %v309
      %v314 = vrcp.pop %v310
      %vm315 = vcmp.ge.f32.partialorder %v231, 0.0
      %vm316 = vcmp.ge.f32.partialorder %v232, 0.0
      %vm317 = vcmp.ge.f32.partialorder %v233, 0.0
      %vm318 = vcmp.ge.f32.partialorder %v234, 0.0
      %v319 = vmul.f32 %v248, %v311
      %v320 = vmul.f32 %v250, %v312
      %v321 = vmul.f32 %v252, %v313
      %v322 = vmul.f32 %v254, %v314
      %v323 = vsel %vm315, %v311, %v319
      %v324 = vsel %vm316, %v312, %v320
      %v325 = vsel %vm317, %v313, %v321
      %v326 = vsel %vm318, %v314, %v322
      %v327 = vsub.f32 %v323, %v235
      %v328 = vsub.f32 %v324, %v236
      %v329 = vsub.f32 %v325, %v237
      %v330 = vsub.f32 %v326, %v238
      %v331 = vsub.f32 %v327, 1.0
      %v332 = vsub.f32 %v328, 1.0
      %v333 = vsub.f32 %v329, 1.0
      %v334 = vsub.f32 %v330, 1.0
      %v335 = vmul.f32 %v331, 19.96008
      %v336 = vmul.f32 %v332, 19.96008
      %v337 = vmul.f32 %v333, 19.96008
      %v338 = vmul.f32 %v334, 19.96008
      %v339 = vmul.f32 %v335, 1.442695
      %v340 = vpow.pop %v339
      %v341 = vmul.f32 %v336, 1.442695
      %v342 = vpow.pop %v341
      %v343 = vmul.f32 %v337, 1.442695
      %v344 = vpow.pop %v343
      %v345 = vmul.f32 %v338, 1.442695
      %v346 = vpow.pop %v345
      %v347 = vsub.f32 1.0, %v340
      %v348 = vsub.f32 1.0, %v342
      %v349 = vsub.f32 1.0, %v344
      %v350 = vsub.f32 1.0, %v346
      %v351 = vmul.f32 %v303, %v347
      %v352 = vmul.f32 %v304, %v348
      %v353 = vmul.f32 %v305, %v349
      %v354 = vmul.f32 %v306, %v350
      %v355 = vlaneseq
      %v356 = vshrl.u32 %v355, 7
      %v357 = vadd.s32 %v356, 8
      %v358 = vadd.s32 %v356, 16
      %v359 = vadd.s32 %v356, 24
      %s360 = smul.u32 %s72, 32
      %v361 = vstv %s360
      %v362 = vadd.s32 %v361, %v356
      %v363 = vadd.s32 %v361, %v357
      %v364 = vadd.s32 %v361, %v358
      %v365 = vadd.s32 %v361, %v359
      %vm366 = vcmp.lt.s32.totalorder %v362, 16
      %vm367 = vcmp.lt.s32.totalorder %v363, 16
      %vm368 = vcmp.lt.s32.totalorder %v364, 16
      %vm369 = vcmp.lt.s32.totalorder %v365, 16
      %v370 = vsel %vm366, %v351, 0.0
      %v371 = vsel %vm367, %v352, 0.0
      %v372 = vsel %vm368, %v353, 0.0
      %v373 = vsel %vm369, %v354, 0.0
      %v374 = vld [vmem:[#allocation7] sm:$0xff]
      %v375 = vld [vmem:[#allocation7 + $0x8] sm:$0xff]
      %v376 = vld [vmem:[#allocation7 + $0x10] sm:$0xff]
      %v377 = vld [vmem:[#allocation7 + $0x18] sm:$0xff]
      %v378 = vadd.f32 %v370, 0.0
      %v379 = vadd.f32 %v371, 0.0
      %v380 = vadd.f32 %v372, 0.0
      %v381 = vadd.f32 %v373, 0.0
      %v382 = vadd.f32 %v374, %v378
      %v383 = vadd.f32 %v375, %v379
      %v384 = vadd.f32 %v376, %v380
      %v385 = vadd.f32 %v377, %v381
      %386 = vst [vmem:[#allocation7] sm:$0xff] %v382
      %387 = vst [vmem:[#allocation7 + $0x8] sm:$0xff] %v383
      %388 = vst [vmem:[#allocation7 + $0x10] sm:$0xff] %v384
      %389 = vst [vmem:[#allocation7 + $0x18] sm:$0xff] %v385
    $region29: #{tpu_custom_call.1} parent=1 // pred_fallthru
      _
    // Predicated region
    $region30: #{tpu_custom_call.1} parent=1 // pred_check
      _
    $region31: #{tpu_custom_call.1} parent=1 // pred_check_branch
      %391 = sbr.rel (0) target = $region33
    $region32: #{tpu_custom_call.1} parent=1 // pred_region
      %s393 = ssub.s32 512, 512
      %394 = vsyncadd [#allocation4], %s393
      %s395 = sshll.u32 [#allocation7], 4
      %s396 = int_to_ptr.vmem [resolvable:$true] %s395
      %401 = dma.vmem_to_hbm [thread:$0]  %s396, 512, %s2, [#allocation4], 128, 128, 8
    $region33: #{tpu_custom_call.1} parent=1 // pred_fallthru
      _
    // Predicated region
    $region34: #{tpu_custom_call.1} parent=1 // pred_check
      _
    $region35: #{tpu_custom_call.1} parent=1 // pred_check_branch
      %403 = sbr.rel (0) target = $region37
    $region36: #{tpu_custom_call.1} parent=1 // pred_region
      %404 = dma.done [#allocation4], 512
    $region37: #{tpu_custom_call.1} parent=1 // pred_fallthru
      _
    %405 = vsyncpa [#allocation3], 1
    %406 = vsyncpa [#allocation6], 1
    %407 = vsyncpa [#allocation4], 1

</llo_original>
